<compile_context>
chip_gen: v5e
topology: v5e:2x2
jax: 0.10.0
libtpu: 0.0.40
codegen_flags: <defaults>
</compile_context>

<pallas_src>
import functools
import math

import jax
import jax.numpy as jnp
from jax import lax
from jax.experimental import pallas as pl
from jax.experimental.pallas import tpu as pltpu


def _round_up(x, m):
    return ((x + m - 1) // m) * m


def _refined_recip(d):
    # EUP approximate reciprocal + one Newton refinement (VPU mul/sub) — avoids
    # a full divide chain while keeping ~f32 accuracy for the 1e-5 tolerance.
    r = pl.reciprocal(d, approx=True)
    return r * (2.0 - d * r)


def _memory_unit_kernel(x_ref, w_ref, bias_ref, out_ref, att_ref, *,
                        has_pad_mem, shrink_thres, eps, matmul_dtype):
    x = x_ref[...]          # (TN, F_pad)
    w = w_ref[...]          # (M_pad, F_pad), resident across grid steps

    # att_logits = x @ W.T : contract the last (fea) dims directly so no
    # transpose/relayout of the weight is materialized.
    att = lax.dot_general(
        x.astype(matmul_dtype), w,
        dimension_numbers=(((1,), (1,)), ((), ())),
        preferred_element_type=jnp.float32)          # (TN, M_pad) f32

    if has_pad_mem:
        # Padded memory slots carry a -1e30 additive bias so they vanish from
        # the softmax row normalization (one VPU add; bias is resident).
        att = att + bias_ref[...]

    # softmax over mem_dim (dim=1)
    att_max = jnp.max(att, axis=-1, keepdims=True)
    e = jnp.exp(att - att_max)
    att = e * _refined_recip(jnp.sum(e, axis=-1, keepdims=True))

    if shrink_thres > 0:
        # hard_shrink_relu: relu(a - lambd) * a / (|a - lambd| + 1e-12),
        # written as multiply-by-reciprocal instead of a tensor divide.
        shifted = att - shrink_thres
        att = (jnp.maximum(shifted, 0.0) * att) * _refined_recip(
            jnp.abs(shifted) + 1e-12)
        # F.normalize(att, p=1, dim=1): att >= 0 after the shrink, so no abs.
        l1 = jnp.sum(att, axis=-1, keepdims=True)
        att = att * _refined_recip(jnp.maximum(l1, eps))

    # output = att @ W   (padded mem rows of W are zero and att there is zero)
    out = jnp.dot(att.astype(w.dtype), w, preferred_element_type=jnp.float32)

    out_ref[...] = out.astype(out_ref.dtype)
    att_ref[...] = att.astype(att_ref.dtype)


def _vmem_budget_bytes():
    """Per-generation usable VMEM budget (leaves compiler/scratch headroom)."""
    capacity = 128 << 20
    try:
        capacity = int(pltpu.get_tpu_info().vmem_capacity_bytes)
    except Exception:
        try:
            kind = jax.devices()[0].device_kind.lower()
            if "v7" in kind:
                capacity = 64 << 20
        except Exception:
            pass
    if capacity <= (64 << 20):
        # v7x: 64 MiB physical per TC — never ask for all of it.
        return min(capacity - (12 << 20), 52 << 20)
    # v5e / v6e: 128 MiB physical.
    return min(capacity - (16 << 20), 112 << 20)


def _max_tile_rows():
    try:
        kind = jax.devices()[0].device_kind.lower()
    except Exception:
        kind = ""
    # v6e benefits from very large row tiles; v5e/v7x stay at 512.
    return 1024 if "v6" in kind else 512


def _estimate_vmem_usage(tn, f_pad, m_pad):
    # double-buffered x/out/att tiles + single-buffered resident weight/bias
    # + headroom for live f32 (TN, M_pad) intermediates (logits/exp/shrink).
    return 4 * (2 * tn * f_pad        # x (double-buffered)
                + 2 * tn * f_pad      # out
                + 2 * tn * m_pad      # att
                + m_pad * f_pad       # weight (single-buffered)
                + m_pad               # padding bias
                + 4 * tn * m_pad)     # in-kernel f32 temporaries


def _pick_tile_n(n, f_pad, m_pad, budget):
    tn = min(_max_tile_rows(), max(_round_up(n, 8), 8))
    # Ensure >=2 grid steps when rows allow (megacore sharding on v7x).
    if n >= 16:
        tn = min(tn, max(8, _round_up((n + 1) // 2, 8)))
    while tn > 8 and _estimate_vmem_usage(tn, f_pad, m_pad) > budget:
        tn = max(8, _round_up(tn // 2, 8))
    return tn


def _build_call(kernel, n_pad, tn, f_pad, m_pad, vmem_bytes, cost,
                single_buffer_const):
    const_kwargs = {}
    if single_buffer_const:
        # Constant-index inputs are never re-fetched: one buffer is enough and
        # halves their VMEM footprint (buys a larger TN, esp. on v7x).
        const_kwargs = dict(pipeline_mode=pl.Buffered(1))
    return pl.pallas_call(
        kernel,
        out_shape=(
            jax.ShapeDtypeStruct((n_pad, f_pad), jnp.float32),
            jax.ShapeDtypeStruct((n_pad, m_pad), jnp.float32),
        ),
        grid_spec=pltpu.PrefetchScalarGridSpec(
            num_scalar_prefetch=0,
            grid=(n_pad // tn,),
            in_specs=[
                pl.BlockSpec((tn, f_pad), lambda i: (i, 0)),
                pl.BlockSpec((m_pad, f_pad), lambda i: (0, 0), **const_kwargs),
                pl.BlockSpec((1, m_pad), lambda i: (0, 0), **const_kwargs),
            ],
            out_specs=[
                pl.BlockSpec((tn, f_pad), lambda i: (i, 0)),
                pl.BlockSpec((tn, m_pad), lambda i: (i, 0)),
            ],
        ),
        compiler_params=pltpu.CompilerParams(
            dimension_semantics=("parallel",),
            vmem_limit_bytes=vmem_bytes,
        ),
        cost_estimate=cost,
    )


def memory_unit_forward(x, weight, shrink_thres=0.0025, *,
                        tile_n=None, use_bf16_matmul=False):
    """x: (N, fea_dim) f32, weight: (mem_dim, fea_dim) f32 -> dict(output, att)."""
    n, fea_dim = x.shape
    mem_dim, fea_dim_w = weight.shape
    assert fea_dim == fea_dim_w

    # Pad to lane-dense / (8,128)-friendly shapes (only when actually needed,
    # to avoid extra wrapper-side HBM passes).
    f_pad = _round_up(fea_dim, 128)
    m_pad = _round_up(mem_dim, 128)

    budget = _vmem_budget_bytes()
    if tile_n is None:
        tn = _pick_tile_n(n, f_pad, m_pad, budget)
    else:
        tn = max(8, min(_round_up(tile_n, 8), _round_up(n, 8)))
    n_pad = _round_up(n, tn)

    x_p = x
    if n_pad != n or f_pad != fea_dim:
        x_p = jnp.pad(x, ((0, n_pad - n), (0, f_pad - fea_dim)))
    w_p = weight
    if m_pad != mem_dim or f_pad != fea_dim:
        w_p = jnp.pad(weight, ((0, m_pad - mem_dim), (0, f_pad - fea_dim)))

    # bf16 matmul halves weight DMA bytes but loosens accuracy below the 1e-5
    # self-test tolerance and the kernel is mem-bound anyway, so it defaults
    # off. When enabled, the weight is cast once here (not per grid step).
    matmul_dtype = jnp.bfloat16 if use_bf16_matmul else jnp.float32
    w_p = w_p.astype(matmul_dtype)

    # Additive padding bias for the softmax: 0 for real slots, -1e30 for padded.
    has_pad_mem = m_pad != mem_dim
    col = jnp.arange(m_pad, dtype=jnp.int32)[None, :]
    bias = jnp.where(col < mem_dim, 0.0, -1e30).astype(jnp.float32)

    kernel = functools.partial(
        _memory_unit_kernel,
        has_pad_mem=has_pad_mem, shrink_thres=shrink_thres, eps=1e-12,
        matmul_dtype=matmul_dtype)

    usage = _estimate_vmem_usage(tn, f_pad, m_pad)
    vmem_bytes = int(min(budget, max(usage, 32 << 20)))

    cost = pl.CostEstimate(
        flops=4 * n_pad * m_pad * f_pad,          # two matmuls
        transcendentals=n_pad * m_pad,            # exp
        bytes_accessed=4 * (2 * n_pad * f_pad + m_pad * f_pad + n_pad * m_pad))

    try:
        call = _build_call(kernel, n_pad, tn, f_pad, m_pad, vmem_bytes, cost,
                           single_buffer_const=True)
        out, att = call(x_p, w_p, bias)
    except Exception:
        # Fallback: default (double-buffered) constant-index inputs.
        call = _build_call(kernel, n_pad, tn, f_pad, m_pad, vmem_bytes, cost,
                           single_buffer_const=False)
        out, att = call(x_p, w_p, bias)

    out_final = out if (n_pad == n and f_pad == fea_dim) else out[:n, :fea_dim]
    att_final = att if (n_pad == n and m_pad == mem_dim) else att[:n, :mem_dim]
    return {"output": out_final, "att": att_final}


def mem_module_forward(x_nchw, weight, shrink_thres=0.0025, *, tile_n=None):
    """MemModule.forward: NCHW -> flatten rows -> MemoryUnit kernel -> NCHW."""
    # TODO(synk): accepting NHWC upstream would remove the transpose pair
    # (an extra HBM round-trip in this mem-bound regime), but NCHW is the
    # module's contract so it is kept here.
    b, c, h, w = x_nchw.shape
    mem_dim = weight.shape[0]
    x = jnp.transpose(x_nchw, (0, 2, 3, 1)).reshape(-1, c)
    res = memory_unit_forward(x, weight, shrink_thres, tile_n=tile_n)
    y = jnp.transpose(res["output"].reshape(b, h, w, c), (0, 3, 1, 2))
    att = jnp.transpose(res["att"].reshape(b, h, w, mem_dim), (0, 3, 1, 2))
    return {"output": y, "att": att}


def _reference_mem_module(x_nchw, weight, shrink_thres=0.0025):
    b, c, h, w = x_nchw.shape
    mem_dim = weight.shape[0]
    x = jnp.transpose(x_nchw, (0, 2, 3, 1)).reshape(-1, c)
    att = x @ weight.T
    att = jax.nn.softmax(att, axis=1)
    if shrink_thres > 0:
        shifted = att - shrink_thres
        att = jnp.maximum(shifted, 0.0) * att / (jnp.abs(shifted) + 1e-12)
        att = att / jnp.maximum(jnp.sum(jnp.abs(att), axis=1, keepdims=True), 1e-12)
    out = att @ weight
    y = jnp.transpose(out.reshape(b, h, w, c), (0, 3, 1, 2))
    att_o = jnp.transpose(att.reshape(b, h, w, mem_dim), (0, 3, 1, 2))
    return {"output": y, "att": att_o}


if __name__ == "__main__":
    # Small shapes consistent with the module: (B, C=fea_dim, H, W) input,
    # mem_dim memory slots. N = B*H*W = 128 flattened rows.
    B, FEA_DIM, H, W = 2, 32, 8, 8
    MEM_DIM = 100
    SHRINK = 0.0025

    key = jax.random.PRNGKey(0)
    kx, kw = jax.random.split(key)

    # Deterministic init matching reset_parameters(): U(-stdv, stdv), stdv=1/sqrt(fea_dim)
    stdv = 1.0 / math.sqrt(FEA_DIM)
    weight = jax.random.uniform(
        kw, (MEM_DIM, FEA_DIM), dtype=jnp.float32, minval=-stdv, maxval=stdv)
    x = jax.random.normal(kx, (B, FEA_DIM, H, W), dtype=jnp.float32)

    # tile_n=32 exercises multiple grid steps (grid=(4,)) at these small shapes.
    result = mem_module_forward(x, weight, shrink_thres=SHRINK, tile_n=32)
    jax.block_until_ready(result)

    # Also exercise the auto-sized tile path once (grid >= 2 steps).
    result_auto = mem_module_forward(x, weight, shrink_thres=SHRINK)
    jax.block_until_ready(result_auto)

    ref = _reference_mem_module(x, weight, shrink_thres=SHRINK)
    assert jnp.allclose(result["att"], ref["att"], atol=1e-5, rtol=1e-5)
    assert jnp.allclose(result["output"], ref["output"], atol=1e-5, rtol=1e-5)
    assert jnp.allclose(result_auto["att"], ref["att"], atol=1e-5, rtol=1e-5)
    assert jnp.allclose(result_auto["output"], ref["output"], atol=1e-5, rtol=1e-5)

    print("KERNEL_OK")
</pallas_src>

<mosaic_0001>
module attributes {stable_mosaic.version = 11 : i64} {
  func.func @_memory_unit_kernel(%arg0: i32, %arg1: memref<32x128xf32, #tpu.memory_space<vmem>>, %arg2: memref<128x128xf32, #tpu.memory_space<vmem>>, %arg3: memref<1x128xf32, #tpu.memory_space<vmem>>, %arg4: memref<32x128xf32, #tpu.memory_space<vmem>>, %arg5: memref<32x128xf32, #tpu.memory_space<vmem>>) attributes {dimension_semantics = [#tpu.dimension_semantics<parallel>], iteration_bounds = array<i64: 4>, scalar_prefetch = 0 : i64, scratch_operands = 0 : i64, tpu.core_type = #tpu.core_type<tc>, window_params = [{transform_indices = @transform_0, window_bounds = array<i64: 32, 128>}, {pipeline_mode = #tpu.pipeline_mode<synchronous>, transform_indices = @transform_1, window_bounds = array<i64: 128, 128>}, {pipeline_mode = #tpu.pipeline_mode<synchronous>, transform_indices = @transform_2, window_bounds = array<i64: 1, 128>}, {transform_indices = @transform_3, window_bounds = array<i64: 32, 128>}, {transform_indices = @transform_4, window_bounds = array<i64: 32, 128>}]} {
    %c0 = arith.constant 0 : index
    %c0_0 = arith.constant 0 : index
    %0 = vector.load %arg1[%c0, %c0_0] : memref<32x128xf32, #tpu.memory_space<vmem>>, vector<32x128xf32>
    %c0_1 = arith.constant 0 : index
    %c0_2 = arith.constant 0 : index
    %1 = vector.load %arg2[%c0_1, %c0_2] : memref<128x128xf32, #tpu.memory_space<vmem>>, vector<128x128xf32>
    %cst = arith.constant dense<0.000000e+00> : vector<32x128xf32>
    %2 = tpu.matmul %0, %1, %cst {dimension_numbers = #tpu.dot_dimension_numbers<[1], [1], [0], [0], [0, 0, 1, 0], [], []>} : vector<32x128xf32>, vector<128x128xf32>, vector<32x128xf32> -> vector<32x128xf32>
    %c0_3 = arith.constant 0 : index
    %c0_4 = arith.constant 0 : index
    %3 = vector.load %arg3[%c0_3, %c0_4] : memref<1x128xf32, #tpu.memory_space<vmem>>, vector<1x128xf32>
    %4 = vector.broadcast %3 : vector<1x128xf32> to vector<32x128xf32>
    %5 = arith.addf %2, %4 : vector<32x128xf32>
    %cst_5 = arith.constant dense<0xFF800000> : vector<32xf32>
    %6 = vector.multi_reduction <maximumf>, %5, %cst_5 [1] : vector<32x128xf32> to vector<32xf32>
    %7 = vector.shape_cast %6 : vector<32xf32> to vector<32x1xf32>
    %8 = vector.broadcast %7 : vector<32x1xf32> to vector<32x128xf32>
    %9 = arith.subf %5, %8 : vector<32x128xf32>
    %10 = math.exp %9 : vector<32x128xf32>
    %cst_6 = arith.constant dense<0.000000e+00> : vector<32xf32>
    %11 = vector.multi_reduction <add>, %10, %cst_6 [1] : vector<32x128xf32> to vector<32xf32>
    %12 = vector.shape_cast %11 : vector<32xf32> to vector<32x1xf32>
    %13 = tpu.reciprocal %12 {approx = true} : vector<32x1xf32> -> vector<32x1xf32>
    %14 = arith.mulf %12, %13 : vector<32x1xf32>
    %cst_7 = arith.constant 2.000000e+00 : f32
    %15 = vector.broadcast %cst_7 : f32 to vector<32x1xf32>
    %16 = arith.subf %15, %14 : vector<32x1xf32>
    %17 = arith.mulf %13, %16 : vector<32x1xf32>
    %18 = vector.broadcast %17 : vector<32x1xf32> to vector<32x128xf32>
    %19 = arith.mulf %10, %18 : vector<32x128xf32>
    %cst_8 = arith.constant 2.500000e-03 : f32
    %20 = vector.broadcast %cst_8 : f32 to vector<32x128xf32>
    %21 = arith.subf %19, %20 : vector<32x128xf32>
    %cst_9 = arith.constant 0.000000e+00 : f32
    %22 = vector.broadcast %cst_9 : f32 to vector<32x128xf32>
    %23 = arith.maximumf %21, %22 : vector<32x128xf32>
    %24 = arith.mulf %23, %19 : vector<32x128xf32>
    %25 = math.absf %21 : vector<32x128xf32>
    %cst_10 = arith.constant 9.99999996E-13 : f32
    %26 = vector.broadcast %cst_10 : f32 to vector<32x128xf32>
    %27 = arith.addf %25, %26 : vector<32x128xf32>
    %28 = tpu.reciprocal %27 {approx = true} : vector<32x128xf32> -> vector<32x128xf32>
    %29 = arith.mulf %27, %28 : vector<32x128xf32>
    %cst_11 = arith.constant 2.000000e+00 : f32
    %30 = vector.broadcast %cst_11 : f32 to vector<32x128xf32>
    %31 = arith.subf %30, %29 : vector<32x128xf32>
    %32 = arith.mulf %28, %31 : vector<32x128xf32>
    %33 = arith.mulf %24, %32 : vector<32x128xf32>
    %cst_12 = arith.constant dense<0.000000e+00> : vector<32xf32>
    %34 = vector.multi_reduction <add>, %33, %cst_12 [1] : vector<32x128xf32> to vector<32xf32>
    %35 = vector.shape_cast %34 : vector<32xf32> to vector<32x1xf32>
    %cst_13 = arith.constant 9.99999996E-13 : f32
    %36 = vector.broadcast %cst_13 : f32 to vector<32x1xf32>
    %37 = arith.maximumf %35, %36 : vector<32x1xf32>
    %38 = tpu.reciprocal %37 {approx = true} : vector<32x1xf32> -> vector<32x1xf32>
    %39 = arith.mulf %37, %38 : vector<32x1xf32>
    %cst_14 = arith.constant 2.000000e+00 : f32
    %40 = vector.broadcast %cst_14 : f32 to vector<32x1xf32>
    %41 = arith.subf %40, %39 : vector<32x1xf32>
    %42 = arith.mulf %38, %41 : vector<32x1xf32>
    %43 = vector.broadcast %42 : vector<32x1xf32> to vector<32x128xf32>
    %44 = arith.mulf %33, %43 : vector<32x128xf32>
    %cst_15 = arith.constant dense<0.000000e+00> : vector<32x128xf32>
    %45 = tpu.matmul %44, %1, %cst_15 {dimension_numbers = #tpu.dot_dimension_numbers<[1], [0], [0], [1], [0, 0, 1, 1], [], []>} : vector<32x128xf32>, vector<128x128xf32>, vector<32x128xf32> -> vector<32x128xf32>
    %c0_16 = arith.constant 0 : index
    %c0_17 = arith.constant 0 : index
    %46 = vector.load %arg4[%c0_16, %c0_17] : memref<32x128xf32, #tpu.memory_space<vmem>>, vector<32x128xf32>
    tpu.vector_store %arg4[%c0_16, %c0_17], %45 {strides = array<i32>} : memref<32x128xf32, #tpu.memory_space<vmem>>, vector<32x128xf32>,
    %c0_18 = arith.constant 0 : index
    %c0_19 = arith.constant 0 : index
    %47 = vector.load %arg5[%c0_18, %c0_19] : memref<32x128xf32, #tpu.memory_space<vmem>>, vector<32x128xf32>
    tpu.vector_store %arg5[%c0_18, %c0_19], %44 {strides = array<i32>} : memref<32x128xf32, #tpu.memory_space<vmem>>, vector<32x128xf32>,
    return
  }
  func.func @transform_0(%arg0: i32) -> (i32, i32) {
    %c0_i32 = arith.constant 0 : i32
    %c0_i32_0 = arith.constant 0 : i32
    return %arg0, %c0_i32 : i32, i32
  }
  func.func @transform_1(%arg0: i32) -> (i32, i32) {
    %c0_i32 = arith.constant 0 : i32
    %c0_i32_0 = arith.constant 0 : i32
    %c0_i32_1 = arith.constant 0 : i32
    return %c0_i32, %c0_i32_0 : i32, i32
  }
  func.func @transform_2(%arg0: i32) -> (i32, i32) {
    %c0_i32 = arith.constant 0 : i32
    %c0_i32_0 = arith.constant 0 : i32
    %c0_i32_1 = arith.constant 0 : i32
    return %c0_i32, %c0_i32_0 : i32, i32
  }
  func.func @transform_3(%arg0: i32) -> (i32, i32) {
    %c0_i32 = arith.constant 0 : i32
    %c0_i32_0 = arith.constant 0 : i32
    return %arg0, %c0_i32 : i32, i32
  }
  func.func @transform_4(%arg0: i32) -> (i32, i32) {
    %c0_i32 = arith.constant 0 : i32
    %c0_i32_0 = arith.constant 0 : i32
    return %arg0, %c0_i32 : i32, i32
  }
}

module attributes {stable_mosaic.version = 11 : i64} {
  func.func @_memory_unit_kernel(%arg0: i32, %arg1: memref<32x128xf32, #tpu.memory_space<vmem>>, %arg2: memref<128x128xf32, #tpu.memory_space<vmem>>, %arg3: memref<1x128xf32, #tpu.memory_space<vmem>>, %arg4: memref<32x128xf32, #tpu.memory_space<vmem>>, %arg5: memref<32x128xf32, #tpu.memory_space<vmem>>) attributes {dimension_semantics = [#tpu.dimension_semantics<parallel>], iteration_bounds = array<i64: 4>, scalar_prefetch = 0 : i64, scratch_operands = 0 : i64, tpu.core_type = #tpu.core_type<tc>, window_params = [{transform_indices = @transform_0, window_bounds = array<i64: 32, 128>}, {pipeline_mode = #tpu.pipeline_mode<synchronous>, transform_indices = @transform_1, window_bounds = array<i64: 128, 128>}, {pipeline_mode = #tpu.pipeline_mode<synchronous>, transform_indices = @transform_2, window_bounds = array<i64: 1, 128>}, {transform_indices = @transform_3, window_bounds = array<i64: 32, 128>}, {transform_indices = @transform_4, window_bounds = array<i64: 32, 128>}]} {
    %c0 = arith.constant 0 : index
    %c0_0 = arith.constant 0 : index
    %0 = vector.load %arg1[%c0, %c0_0] : memref<32x128xf32, #tpu.memory_space<vmem>>, vector<32x128xf32>
    %c0_1 = arith.constant 0 : index
    %c0_2 = arith.constant 0 : index
    %1 = vector.load %arg2[%c0_1, %c0_2] : memref<128x128xf32, #tpu.memory_space<vmem>>, vector<128x128xf32>
    %cst = arith.constant dense<0.000000e+00> : vector<32x128xf32>
    %2 = tpu.matmul %0, %1, %cst {dimension_numbers = #tpu.dot_dimension_numbers<[1], [1], [0], [0], [0, 0, 1, 0], [], []>} : vector<32x128xf32>, vector<128x128xf32>, vector<32x128xf32> -> vector<32x128xf32>
    %c0_3 = arith.constant 0 : index
    %c0_4 = arith.constant 0 : index
    %3 = vector.load %arg3[%c0_3, %c0_4] : memref<1x128xf32, #tpu.memory_space<vmem>>, vector<1x128xf32>
    %4 = vector.broadcast %3 : vector<1x128xf32> to vector<32x128xf32>
    %5 = arith.addf %2, %4 : vector<32x128xf32>
    %cst_5 = arith.constant dense<0xFF800000> : vector<32xf32>
    %6 = vector.multi_reduction <maximumf>, %5, %cst_5 [1] : vector<32x128xf32> to vector<32xf32>
    %7 = vector.shape_cast %6 : vector<32xf32> to vector<32x1xf32>
    %8 = vector.broadcast %7 : vector<32x1xf32> to vector<32x128xf32>
    %9 = arith.subf %5, %8 : vector<32x128xf32>
    %10 = math.exp %9 : vector<32x128xf32>
    %cst_6 = arith.constant dense<0.000000e+00> : vector<32xf32>
    %11 = vector.multi_reduction <add>, %10, %cst_6 [1] : vector<32x128xf32> to vector<32xf32>
    %12 = vector.shape_cast %11 : vector<32xf32> to vector<32x1xf32>
    %13 = tpu.reciprocal %12 {approx = true} : vector<32x1xf32> -> vector<32x1xf32>
    %14 = arith.mulf %12, %13 : vector<32x1xf32>
    %cst_7 = arith.constant 2.000000e+00 : f32
    %15 = vector.broadcast %cst_7 : f32 to vector<32x1xf32>
    %16 = arith.subf %15, %14 : vector<32x1xf32>
    %17 = arith.mulf %13, %16 : vector<32x1xf32>
    %18 = vector.broadcast %17 : vector<32x1xf32> to vector<32x128xf32>
    %19 = arith.mulf %10, %18 : vector<32x128xf32>
    %cst_8 = arith.constant 2.500000e-03 : f32
    %20 = vector.broadcast %cst_8 : f32 to vector<32x128xf32>
    %21 = arith.subf %19, %20 : vector<32x128xf32>
    %cst_9 = arith.constant 0.000000e+00 : f32
    %22 = vector.broadcast %cst_9 : f32 to vector<32x128xf32>
    %23 = arith.maximumf %21, %22 : vector<32x128xf32>
    %24 = arith.mulf %23, %19 : vector<32x128xf32>
    %25 = math.absf %21 : vector<32x128xf32>
    %cst_10 = arith.constant 9.99999996E-13 : f32
    %26 = vector.broadcast %cst_10 : f32 to vector<32x128xf32>
    %27 = arith.addf %25, %26 : vector<32x128xf32>
    %28 = tpu.reciprocal %27 {approx = true} : vector<32x128xf32> -> vector<32x128xf32>
    %29 = arith.mulf %27, %28 : vector<32x128xf32>
    %cst_11 = arith.constant 2.000000e+00 : f32
    %30 = vector.broadcast %cst_11 : f32 to vector<32x128xf32>
    %31 = arith.subf %30, %29 : vector<32x128xf32>
    %32 = arith.mulf %28, %31 : vector<32x128xf32>
    %33 = arith.mulf %24, %32 : vector<32x128xf32>
    %cst_12 = arith.constant dense<0.000000e+00> : vector<32xf32>
    %34 = vector.multi_reduction <add>, %33, %cst_12 [1] : vector<32x128xf32> to vector<32xf32>
    %35 = vector.shape_cast %34 : vector<32xf32> to vector<32x1xf32>
    %cst_13 = arith.constant 9.99999996E-13 : f32
    %36 = vector.broadcast %cst_13 : f32 to vector<32x1xf32>
    %37 = arith.maximumf %35, %36 : vector<32x1xf32>
    %38 = tpu.reciprocal %37 {approx = true} : vector<32x1xf32> -> vector<32x1xf32>
    %39 = arith.mulf %37, %38 : vector<32x1xf32>
    %cst_14 = arith.constant 2.000000e+00 : f32
    %40 = vector.broadcast %cst_14 : f32 to vector<32x1xf32>
    %41 = arith.subf %40, %39 : vector<32x1xf32>
    %42 = arith.mulf %38, %41 : vector<32x1xf32>
    %43 = vector.broadcast %42 : vector<32x1xf32> to vector<32x128xf32>
    %44 = arith.mulf %33, %43 : vector<32x128xf32>
    %cst_15 = arith.constant dense<0.000000e+00> : vector<32x128xf32>
    %45 = tpu.matmul %44, %1, %cst_15 {dimension_numbers = #tpu.dot_dimension_numbers<[1], [0], [0], [1], [0, 0, 1, 1], [], []>} : vector<32x128xf32>, vector<128x128xf32>, vector<32x128xf32> -> vector<32x128xf32>
    %c0_16 = arith.constant 0 : index
    %c0_17 = arith.constant 0 : index
    %46 = vector.load %arg4[%c0_16, %c0_17] : memref<32x128xf32, #tpu.memory_space<vmem>>, vector<32x128xf32>
    tpu.vector_store %arg4[%c0_16, %c0_17], %45 {strides = array<i32>} : memref<32x128xf32, #tpu.memory_space<vmem>>, vector<32x128xf32>,
    %c0_18 = arith.constant 0 : index
    %c0_19 = arith.constant 0 : index
    %47 = vector.load %arg5[%c0_18, %c0_19] : memref<32x128xf32, #tpu.memory_space<vmem>>, vector<32x128xf32>
    tpu.vector_store %arg5[%c0_18, %c0_19], %44 {strides = array<i32>} : memref<32x128xf32, #tpu.memory_space<vmem>>, vector<32x128xf32>,
    return
  }
  func.func @transform_0(%arg0: i32) -> (i32, i32) {
    %c0_i32 = arith.constant 0 : i32
    %c0_i32_0 = arith.constant 0 : i32
    return %arg0, %c0_i32 : i32, i32
  }
  func.func @transform_1(%arg0: i32) -> (i32, i32) {
    %c0_i32 = arith.constant 0 : i32
    %c0_i32_0 = arith.constant 0 : i32
    %c0_i32_1 = arith.constant 0 : i32
    return %c0_i32, %c0_i32_0 : i32, i32
  }
  func.func @transform_2(%arg0: i32) -> (i32, i32) {
    %c0_i32 = arith.constant 0 : i32
    %c0_i32_0 = arith.constant 0 : i32
    %c0_i32_1 = arith.constant 0 : i32
    return %c0_i32, %c0_i32_0 : i32, i32
  }
  func.func @transform_3(%arg0: i32) -> (i32, i32) {
    %c0_i32 = arith.constant 0 : i32
    %c0_i32_0 = arith.constant 0 : i32
    return %arg0, %c0_i32 : i32, i32
  }
  func.func @transform_4(%arg0: i32) -> (i32, i32) {
    %c0_i32 = arith.constant 0 : i32
    %c0_i32_0 = arith.constant 0 : i32
    return %arg0, %c0_i32 : i32, i32
  }
}

</mosaic_0001>

<llo_original>
// kernel: tpu_custom_call.1
$region0: #{tpu_custom_call.1}
  #allocation0 [shape = 'u32[]', space=smem, size = 0x4, offset = 0x4, fixed_abs, tag = 'smem constant byte address 0x4 - core index']
  #allocation1 [shape = 'u32[72,128]{1,0:T(1,128)}', space=vmem, size = 0x9000, scoped, tag = 'internal scratch']
  %s0 = inlined_call_operand.hbm [shape: f32[128,128], index: 0, kind: input, shape index: {}]
  %s1 = inlined_call_operand.hbm [shape: f32[128,128], index: 1, kind: input, shape index: {}]
  %s2 = inlined_call_operand.vmem [shape: f32[1,128], index: 2, kind: input, shape index: {}]
  %s3 = inlined_call_operand.hbm [shape: f32[128,128], index: 3, kind: output, shape index: {0}]
  %s4 = inlined_call_operand.hbm [shape: f32[128,128], index: 4, kind: output, shape index: {1}]
  %5 = xla_tuple %s3, %s4
  %s6 = sld [smem:[#allocation0]]
  $region61: #{tpu_custom_call.1} parent=0
    _
  %s8 = ssub.s32 1, %s6
  %s9 = scalar_select 0, %s8, %s6
  $region1: #{tpu_custom_call.1} parent=0
    #allocation2 [shape = 'u8[32768]{0}', space=vmem, size = 0x8000, scoped, tag = 'input window, operand 0']
    #allocation3 [shape = 's32[2]{0}', space=sflag, size = 0x8, scoped, tag = 'scoped memory for tpu_custom_call.1']
    #allocation4 [shape = 's32[2]{0}', space=sflag, size = 0x8, scoped, tag = 'scoped memory for tpu_custom_call.1']
    #allocation5 [shape = 'u8[65536]{0}', space=vmem, size = 0x10000, scoped, tag = 'input window, operand 1, single buffered']
    #allocation6 [shape = 's32[1]{0}', space=sflag, size = 0x4, scoped, tag = 'scoped memory for tpu_custom_call.1']
    #allocation7 [shape = 'u8[32768]{0}', space=vmem, size = 0x8000, scoped, tag = 'output window, operand 0']
    #allocation8 [shape = 'u8[32768]{0}', space=vmem, size = 0x8000, scoped, tag = 'output window, operand 1']
    #allocation9 [shape = 's32[2]{0}', space=sflag, size = 0x8, scoped, tag = 'scoped memory for tpu_custom_call.1']
    %10 = vsyncpa [#allocation3], 0
    %s11 = scalar_lea.sflag [#allocation3], 1
    %12 = vsyncpa %s11, 0
    %13 = vsyncpa [#allocation6], 0
    %14 = vsyncpa [#allocation4], 0
    %s15 = scalar_lea.sflag [#allocation4], 1
    %16 = vsyncpa %s15, 0
    %17 = vsyncpa [#allocation9], 0
    %s18 = scalar_lea.sflag [#allocation9], 1
    %19 = vsyncpa %s18, 0
    loop: start=0, step=1, limit=6
    $region2: #{tpu_custom_call.1} parent=1 // loop_pre_header
      _
    $region3: #{tpu_custom_call.1} parent=1 // loop_header
      %s21 = sphi 0, %s25
      %p22 = scmp.ge.s32.totalorder %s21, 6
      %s31 = sphi 0, %s33
      %s34 = sphi 0, %s31
      %s35 = sphi 0, %s34
      %s51 = sphi 0, %s35
      %s55 = sphi 0, %s55
      %s57 = sphi 0, %s55
      %s58 = sphi 0, %s57
      %s72 = sphi 0, %s58
      %s76 = sphi 0, %s76
      %s78 = sphi 0, %s76
      %s79 = sphi 0, %s78
      %s93 = sphi 0, %s79
      %s99 = sphi 0, %s101
      %s102 = sphi 0, %s99
      %s103 = sphi 0, %s102
      %s119 = sphi 0, %s103
      %s125 = sphi 0, %s127
      %s128 = sphi 0, %s125
      %s129 = sphi 0, %s128
      %s145 = sphi 0, %s129
    $region4: #{tpu_custom_call.1} parent=1 // loop_header_branch
      %24 = sbr.rel (%p22) target = $region8
    $region5: #{tpu_custom_call.1} parent=1 // loop_body
      %s26 = ssub.s32 %s21, 1
      %s27 = ssub.s32 %s21, 2
      %s28 = sadd.s32 %s21, 1
      %s29 = ssub.s32 %s21, %s28
      %p30 = scmp.eq.s32.totalorder %s29, 0
      %s32 = sadd.s32 %s31, 1
      %s33 = scalar_select %p30, %s31, %s32
      %p36 = pneg %p30
      %p37 = scmp.eq.s32.totalorder %s21, 3
      %p38 = por %p36, %p37
      %p39 = scmp.ne.s32.totalorder %s31, %s34
      %p40 = scmp.eq.s32.totalorder %s21, 0
      %p41 = por %p39, %p40
      %p42 = scmp.ne.s32.totalorder %s31, %s34
      %p43 = scmp.eq.s32.totalorder %s26, 3
      %p44 = por %p42, %p43
      %p45 = scmp.ne.s32.totalorder %s34, %s35
      %p46 = scmp.eq.s32.totalorder %s26, 0
      %p47 = por %p45, %p46
      %p48 = scmp.ne.s32.totalorder %s34, %s35
      %p49 = scmp.eq.s32.totalorder %s27, 3
      %p50 = por %p48, %p49
      %p52 = scmp.ne.s32.totalorder %s35, %s51
      %p53 = scmp.eq.s32.totalorder %s27, 0
      %p54 = por %p52, %p53
      %s56 = sadd.s32 %s55, 1
      %p59 = scmp.eq.s32.totalorder %s21, 3
      %p60 = scmp.ne.s32.totalorder %s55, %s57
      %p61 = scmp.eq.s32.totalorder %s21, 0
      %p62 = por %p60, %p61
      %p63 = scmp.ne.s32.totalorder %s55, %s57
      %p64 = scmp.eq.s32.totalorder %s26, 3
      %p65 = por %p63, %p64
      %p66 = scmp.ne.s32.totalorder %s57, %s58
      %p67 = scmp.eq.s32.totalorder %s26, 0
      %p68 = por %p66, %p67
      %p69 = scmp.ne.s32.totalorder %s57, %s58
      %p70 = scmp.eq.s32.totalorder %s27, 3
      %p71 = por %p69, %p70
      %p73 = scmp.ne.s32.totalorder %s58, %s72
      %p74 = scmp.eq.s32.totalorder %s27, 0
      %p75 = por %p73, %p74
      %s77 = sadd.s32 %s76, 1
      %p80 = scmp.eq.s32.totalorder %s21, 3
      %p81 = scmp.ne.s32.totalorder %s76, %s78
      %p82 = scmp.eq.s32.totalorder %s21, 0
      %p83 = por %p81, %p82
      %p84 = scmp.ne.s32.totalorder %s76, %s78
      %p85 = scmp.eq.s32.totalorder %s26, 3
      %p86 = por %p84, %p85
      %p87 = scmp.ne.s32.totalorder %s78, %s79
      %p88 = scmp.eq.s32.totalorder %s26, 0
      %p89 = por %p87, %p88
      %p90 = scmp.ne.s32.totalorder %s78, %s79
      %p91 = scmp.eq.s32.totalorder %s27, 3
      %p92 = por %p90, %p91
      %p94 = scmp.ne.s32.totalorder %s79, %s93
      %p95 = scmp.eq.s32.totalorder %s27, 0
      %p96 = por %p94, %p95
      %s97 = ssub.s32 %s21, %s28
      %p98 = scmp.eq.s32.totalorder %s97, 0
      %s100 = sadd.s32 %s99, 1
      %s101 = scalar_select %p98, %s99, %s100
      %p104 = pneg %p98
      %p105 = scmp.eq.s32.totalorder %s21, 3
      %p106 = por %p104, %p105
      %p107 = scmp.ne.s32.totalorder %s99, %s102
      %p108 = scmp.eq.s32.totalorder %s21, 0
      %p109 = por %p107, %p108
      %p110 = scmp.ne.s32.totalorder %s99, %s102
      %p111 = scmp.eq.s32.totalorder %s26, 3
      %p112 = por %p110, %p111
      %p113 = scmp.ne.s32.totalorder %s102, %s103
      %p114 = scmp.eq.s32.totalorder %s26, 0
      %p115 = por %p113, %p114
      %p116 = scmp.ne.s32.totalorder %s102, %s103
      %p117 = scmp.eq.s32.totalorder %s27, 3
      %p118 = por %p116, %p117
      %p120 = scmp.ne.s32.totalorder %s103, %s119
      %p121 = scmp.eq.s32.totalorder %s27, 0
      %p122 = por %p120, %p121
      %s123 = ssub.s32 %s21, %s28
      %p124 = scmp.eq.s32.totalorder %s123, 0
      %s126 = sadd.s32 %s125, 1
      %s127 = scalar_select %p124, %s125, %s126
      %p130 = pneg %p124
      %p131 = scmp.eq.s32.totalorder %s21, 3
      %p132 = por %p130, %p131
      %p133 = scmp.ne.s32.totalorder %s125, %s128
      %p134 = scmp.eq.s32.totalorder %s21, 0
      %p135 = por %p133, %p134
      %p136 = scmp.ne.s32.totalorder %s125, %s128
      %p137 = scmp.eq.s32.totalorder %s26, 3
      %p138 = por %p136, %p137
      %p139 = scmp.ne.s32.totalorder %s128, %s129
      %p140 = scmp.eq.s32.totalorder %s26, 0
      %p141 = por %p139, %p140
      %p142 = scmp.ne.s32.totalorder %s128, %s129
      %p143 = scmp.eq.s32.totalorder %s27, 3
      %p144 = por %p142, %p143
      %p146 = scmp.ne.s32.totalorder %s129, %s145
      %p147 = scmp.eq.s32.totalorder %s27, 0
      %p148 = por %p146, %p147
      %p149 = scmp.le.s32.totalorder 1, %s21
      %p150 = scmp.lt.s32.totalorder %s21, 5
      %p151 = pnand %p149, %p150
      %p152 = pneg %p151
      // Predicated region
      $region9: #{tpu_custom_call.1} parent=5 // pred_check
        _
      $region10: #{tpu_custom_call.1} parent=5 // pred_check_branch
        %154 = sbr.rel (%p151) target = $region12
      $region11: #{tpu_custom_call.1} parent=5 // pred_region
        %s155 = ssub.s32 %s21, 1
        // Predicated region
        $region13: #{tpu_custom_call.1} parent=11 // pred_check
          %p156 = pneg %p68
        $region14: #{tpu_custom_call.1} parent=11 // pred_check_branch
          %158 = sbr.rel (%p156) target = $region16
        $region15: #{tpu_custom_call.1} parent=11 // pred_region
          %160 = vsyncadd [#allocation6], 0
          %s161 = sshll.u32 %s1, 4
          %s162 = int_to_ptr.hbm [resolvable:$true] %s161
          %s163 = sshll.u32 [#allocation5], 4
          %s164 = int_to_ptr.vmem [resolvable:$true] %s163
          %169 = dma.hbm_to_vmem [thread:$0]  %s162, 2048, %s164, [#allocation6], 128, 128, 8
        $region16: #{tpu_custom_call.1} parent=11 // pred_fallthru
          _
        // Predicated region
        $region17: #{tpu_custom_call.1} parent=11 // pred_check
          %p170 = pneg %p89
        $region18: #{tpu_custom_call.1} parent=11 // pred_check_branch
          %172 = sbr.rel (%p170) target = $region20
        $region19: #{tpu_custom_call.1} parent=11 // pred_region
          _
        $region20: #{tpu_custom_call.1} parent=11 // pred_fallthru
          _
      $region12: #{tpu_custom_call.1} parent=5 // pred_fallthru
        _
      %p173 = scmp.lt.s32.totalorder %s21, 4
      // Predicated region
      $region21: #{tpu_custom_call.1} parent=5 // pred_check
        %p174 = pneg %p173
      $region22: #{tpu_custom_call.1} parent=5 // pred_check_branch
        %176 = sbr.rel (%p174) target = $region24
      $region23: #{tpu_custom_call.1} parent=5 // pred_region
        // Predicated region
        $region25: #{tpu_custom_call.1} parent=23 // pred_check
          %p177 = pneg %p41
        $region26: #{tpu_custom_call.1} parent=23 // pred_check_branch
          %179 = sbr.rel (%p177) target = $region28
        $region27: #{tpu_custom_call.1} parent=23 // pred_region
          %s180 = sand.u32 %s31, 1
          %s181 = scalar_lea.sflag [#allocation3], %s180
          %s182 = sand.u32 %s31, 1
          %s183 = smul.addr %s182, 32
          %s184 = scalar_lea.vmem [#allocation2], %s183
          %s185 = smul.u32 4, %s21
          %187 = vsyncadd %s181, 0
          %s188 = smul.addr %s185, 8
          %s189 = scalar_lea.hbm %s0, %s188
          %s190 = sshll.u32 %s189, 4
          %s191 = int_to_ptr.hbm [resolvable:$true] %s190
          %s192 = sshll.u32 %s184, 4
          %s193 = int_to_ptr.vmem [resolvable:$true] %s192
          %198 = dma.hbm_to_vmem [thread:$0]  %s191, 512, %s193, %s181, 128, 128, 8
        $region28: #{tpu_custom_call.1} parent=23 // pred_fallthru
          _
      $region24: #{tpu_custom_call.1} parent=5 // pred_fallthru
        _
      %p199 = scmp.le.s32.totalorder 1, %s21
      %p200 = scmp.lt.s32.totalorder %s21, 5
      %p201 = pnand %p199, %p200
      %p202 = pneg %p201
      // Predicated region
      $region29: #{tpu_custom_call.1} parent=5 // pred_check
        _
      $region30: #{tpu_custom_call.1} parent=5 // pred_check_branch
        %204 = sbr.rel (%p201) target = $region32
      $region31: #{tpu_custom_call.1} parent=5 // pred_region
        %s205 = ssub.s32 %s21, 1
        %s206 = sand.u32 %s34, 1
        %s207 = scalar_lea.sflag [#allocation3], %s206
        %s208 = sand.u32 %s34, 1
        %s209 = smul.addr %s208, 32
        %s210 = scalar_lea.vmem [#allocation2], %s209
        // Predicated region
        $region33: #{tpu_custom_call.1} parent=31 // pred_check
          %p211 = pneg %p47
        $region34: #{tpu_custom_call.1} parent=31 // pred_check_branch
          %213 = sbr.rel (%p211) target = $region36
        $region35: #{tpu_custom_call.1} parent=31 // pred_region
          %215 = dma.done %s207, 512
        $region36: #{tpu_custom_call.1} parent=31 // pred_fallthru
          _
        // Predicated region
        $region37: #{tpu_custom_call.1} parent=31 // pred_check
          %p216 = pneg %p68
        $region38: #{tpu_custom_call.1} parent=31 // pred_check_branch
          %218 = sbr.rel (%p216) target = $region40
        $region39: #{tpu_custom_call.1} parent=31 // pred_region
          %220 = dma.done [#allocation6], 2048
        $region40: #{tpu_custom_call.1} parent=31 // pred_fallthru
          _
        %s221 = sand.u32 %s34, 1
        %s222 = scalar_lea.sflag [#allocation3], %s221
        %s223 = sand.u32 %s34, 1
        %s224 = smul.addr %s223, 32
        %s225 = scalar_lea.vmem [#allocation2], %s224
        %p226 = pneg %p47
        %p227 = pneg %p44
        %p228 = pneg %p68
        %p229 = pneg %p65
        %p230 = pneg %p89
        %p231 = pneg %p86
        %p232 = pneg %p115
        %p233 = pneg %p112
        %s234 = sand.u32 %s102, 1
        %s235 = scalar_lea.sflag [#allocation4], %s234
        %s236 = sand.u32 %s102, 1
        %s237 = smul.addr %s236, 32
        %s238 = scalar_lea.vmem [#allocation7], %s237
        %p239 = pneg %p141
        %p240 = pneg %p138
        %s241 = sand.u32 %s128, 1
        %s242 = scalar_lea.sflag [#allocation9], %s241
        %s243 = sand.u32 %s128, 1
        %s244 = smul.addr %s243, 32
        %s245 = scalar_lea.vmem [#allocation8], %s244
        %s246 = smul.u32 4, %s26
        %s247 = smul.u32 4, %s26
        %s248 = smul.u32 4, %s26
        %v249 = vld [vmem:[%s210] sm:$0xff]
        %v250 = vld [vmem:[%s210 + $0x8] sm:$0xff]
        %v251 = vld [vmem:[%s210 + $0x10] sm:$0xff]
        %v252 = vld [vmem:[%s210 + $0x18] sm:$0xff]
        %v253 = vld [vmem:[#allocation5] sm:$0xff]
        %v254 = vld [vmem:[#allocation5 + $0x8] sm:$0xff]
        %v255 = vld [vmem:[#allocation5 + $0x10] sm:$0xff]
        %v256 = vld [vmem:[#allocation5 + $0x18] sm:$0xff]
        %v257 = vld [vmem:[#allocation5 + $0x20] sm:$0xff]
        %v258 = vld [vmem:[#allocation5 + $0x28] sm:$0xff]
        %v259 = vld [vmem:[#allocation5 + $0x30] sm:$0xff]
        %v260 = vld [vmem:[#allocation5 + $0x38] sm:$0xff]
        %v261 = vld [vmem:[#allocation5 + $0x40] sm:$0xff]
        %v262 = vld [vmem:[#allocation5 + $0x48] sm:$0xff]
        %v263 = vld [vmem:[#allocation5 + $0x50] sm:$0xff]
        %v264 = vld [vmem:[#allocation5 + $0x58] sm:$0xff]
        %v265 = vld [vmem:[#allocation5 + $0x60] sm:$0xff]
        %v266 = vld [vmem:[#allocation5 + $0x68] sm:$0xff]
        %v267 = vld [vmem:[#allocation5 + $0x70] sm:$0xff]
        %v268 = vld [vmem:[#allocation5 + $0x78] sm:$0xff]
        %v269 = vld [vmem:[%s2] sm:$0x1]
        %v271 = vperm.slane %v269, 0
        %273 = vmatpush.xpose.msra.mxu0 %v268
        %274 = vmatpush.xpose.msra.mxu0 %v267
        %275 = vmatpush.xpose.msra.mxu0 %v266
        %276 = vmatpush.xpose.msra.mxu0 %v265
        %277 = vmatpush.xpose.msra.mxu0 %v264
        %278 = vmatpush.xpose.msra.mxu0 %v263
        %279 = vmatpush.xpose.msra.mxu0 %v262
        %280 = vmatpush.xpose.msra.mxu0 %v261
        %281 = vmatpush.xpose.msra.mxu0 %v260
        %282 = vmatpush.xpose.msra.mxu0 %v259
        %283 = vmatpush.xpose.msra.mxu0 %v258
        %284 = vmatpush.xpose.msra.mxu0 %v257
        %285 = vmatpush.xpose.msra.mxu0 %v256
        %286 = vmatpush.xpose.msra.mxu0 %v255
        %287 = vmatpush.xpose.msra.mxu0 %v254
        %288 = vmatpush.xpose.msra.mxu0 %v253
        %289 = vmatmul.f32.gmra.mxu0 %v249
        %v290 = vpop.f32.mrf.mxu0
        %v291 = vadd.f32 %v271, %v290
        %292 = vmatmul.f32.gmra.mxu0 %v250
        %v293 = vpop.f32.mrf.mxu0
        %v294 = vadd.f32 %v271, %v293
        %295 = vmatmul.f32.gmra.mxu0 %v251
        %v296 = vpop.f32.mrf.mxu0
        %v297 = vadd.f32 %v271, %v296
        %298 = vmatmul.f32.gmra.mxu0 %v252
        %v299 = vpop.f32.mrf.mxu0
        %v300 = vadd.f32 %v271, %v299
        %301 = vdwg.mxu0
        %302 = vmax.xlane.f32.xlu0 %v291
        %v303 = vpop.xlane.xlu0 %302
        %304 = vmax.xlane.f32.xlu0 %v294
        %v305 = vpop.xlane.xlu0 %304
        %306 = vmax.xlane.f32.xlu0 %v297
        %v307 = vpop.xlane.xlu0 %306
        %308 = vmax.xlane.f32.xlu0 %v300
        %v309 = vpop.xlane.xlu0 %308
        %v310 = vsub.f32 %v291, %v303
        %v311 = vsub.f32 %v294, %v305
        %v312 = vsub.f32 %v297, %v307
        %v313 = vsub.f32 %v300, %v309
        %v314 = vmul.f32 %v310, 1.442695
        %v315 = vpow.pop %v314
        %v316 = vmul.f32 %v311, 1.442695
        %v317 = vpow.pop %v316
        %v318 = vmul.f32 %v312, 1.442695
        %v319 = vpow.pop %v318
        %v320 = vmul.f32 %v313, 1.442695
        %v321 = vpow.pop %v320
        %322 = vadd.xlane.f32.xlu0 %v315
        %v323 = vpop.xlane.xlu0 %322
        %324 = vadd.xlane.f32.xlu0 %v317
        %v325 = vpop.xlane.xlu0 %324
        %326 = vadd.xlane.f32.xlu0 %v319
        %v327 = vpop.xlane.xlu0 %326
        %328 = vadd.xlane.f32.xlu0 %v321
        %v329 = vpop.xlane.xlu0 %328
        %v330 = vrcp.pop %v323
        %v331 = vrcp.pop %v325
        %v332 = vrcp.pop %v327
        %v333 = vrcp.pop %v329
        %v334 = vmul.f32 %v323, %v330
        %v335 = vmul.f32 %v325, %v331
        %v336 = vmul.f32 %v327, %v332
        %v337 = vmul.f32 %v329, %v333
        %v338 = vsub.f32 2.0, %v334
        %v339 = vsub.f32 2.0, %v335
        %v340 = vsub.f32 2.0, %v336
        %v341 = vsub.f32 2.0, %v337
        %v342 = vmul.f32 %v330, %v338
        %v343 = vmul.f32 %v331, %v339
        %v344 = vmul.f32 %v332, %v340
        %v345 = vmul.f32 %v333, %v341
        %v346 = vmul.f32 %v315, %v342
        %v347 = vmul.f32 %v317, %v343
        %v348 = vmul.f32 %v319, %v344
        %v349 = vmul.f32 %v321, %v345
        %v350 = vsub.f32 %v346, 0.0025
        %v351 = vsub.f32 %v347, 0.0025
        %v352 = vsub.f32 %v348, 0.0025
        %v353 = vsub.f32 %v349, 0.0025
        %v354 = vmax.f32 %v350, 0.0
        %v355 = vmax.f32 %v351, 0.0
        %v356 = vmax.f32 %v352, 0.0
        %v357 = vmax.f32 %v353, 0.0
        %v358 = vmul.f32 %v354, %v346
        %v359 = vmul.f32 %v355, %v347
        %v360 = vmul.f32 %v356, %v348
        %v361 = vmul.f32 %v357, %v349
        %v362 = vand.u32 2147483647, %v350
        %v363 = vand.u32 2147483647, %v351
        %v364 = vand.u32 2147483647, %v352
        %v365 = vand.u32 2147483647, %v353
        %v366 = vadd.f32 %v362, 1e-12
        %v367 = vadd.f32 %v363, 1e-12
        %v368 = vadd.f32 %v364, 1e-12
        %v369 = vadd.f32 %v365, 1e-12
        %v370 = vrcp.pop %v366
        %v371 = vrcp.pop %v367
        %v372 = vrcp.pop %v368
        %v373 = vrcp.pop %v369
        %v374 = vmul.f32 %v366, %v370
        %v375 = vmul.f32 %v367, %v371
        %v376 = vmul.f32 %v368, %v372
        %v377 = vmul.f32 %v369, %v373
        %v378 = vsub.f32 2.0, %v374
        %v379 = vsub.f32 2.0, %v375
        %v380 = vsub.f32 2.0, %v376
        %v381 = vsub.f32 2.0, %v377
        %v382 = vmul.f32 %v370, %v378
        %v383 = vmul.f32 %v371, %v379
        %v384 = vmul.f32 %v372, %v380
        %v385 = vmul.f32 %v373, %v381
        %v386 = vmul.f32 %v358, %v382
        %v387 = vmul.f32 %v359, %v383
        %v388 = vmul.f32 %v360, %v384
        %v389 = vmul.f32 %v361, %v385
        %390 = vadd.xlane.f32.xlu0 %v386
        %v391 = vpop.xlane.xlu0 %390
        %392 = vadd.xlane.f32.xlu0 %v387
        %v393 = vpop.xlane.xlu0 %392
        %394 = vadd.xlane.f32.xlu0 %v388
        %v395 = vpop.xlane.xlu0 %394
        %396 = vadd.xlane.f32.xlu0 %v389
        %v397 = vpop.xlane.xlu0 %396
        %v398 = vmax.f32 %v391, 1e-12
        %v399 = vmax.f32 %v393, 1e-12
        %v400 = vmax.f32 %v395, 1e-12
        %v401 = vmax.f32 %v397, 1e-12
        %v402 = vrcp.pop %v398
        %v403 = vrcp.pop %v399
        %v404 = vrcp.pop %v400
        %v405 = vrcp.pop %v401
        %v406 = vmul.f32 %v398, %v402
        %v407 = vmul.f32 %v399, %v403
        %v408 = vmul.f32 %v400, %v404
        %v409 = vmul.f32 %v401, %v405
        %v410 = vsub.f32 2.0, %v406
        %v411 = vsub.f32 2.0, %v407
        %v412 = vsub.f32 2.0, %v408
        %v413 = vsub.f32 2.0, %v409
        %v414 = vmul.f32 %v402, %v410
        %v415 = vmul.f32 %v403, %v411
        %v416 = vmul.f32 %v404, %v412
        %v417 = vmul.f32 %v405, %v413
        %v418 = vmul.f32 %v386, %v414
        %v419 = vmul.f32 %v387, %v415
        %v420 = vmul.f32 %v388, %v416
        %v421 = vmul.f32 %v389, %v417
        %422 = vmatpush.msra.mxu0 %v268
        %423 = vmatpush.msra.mxu0 %v267
        %424 = vmatpush.msra.mxu0 %v266
        %425 = vmatpush.msra.mxu0 %v265
        %426 = vmatpush.msra.mxu0 %v264
        %427 = vmatpush.msra.mxu0 %v263
        %428 = vmatpush.msra.mxu0 %v262
        %429 = vmatpush.msra.mxu0 %v261
        %430 = vmatpush.msra.mxu0 %v260
        %431 = vmatpush.msra.mxu0 %v259
        %432 = vmatpush.msra.mxu0 %v258
        %433 = vmatpush.msra.mxu0 %v257
        %434 = vmatpush.msra.mxu0 %v256
        %435 = vmatpush.msra.mxu0 %v255
        %436 = vmatpush.msra.mxu0 %v254
        %437 = vmatpush.msra.mxu0 %v253
        %438 = vmatmul.f32.gmra.mxu0 %v418
        %v439 = vpop.f32.mrf.mxu0
        %v440 = vadd.f32 0.0, %v439
        %441 = vmatmul.f32.gmra.mxu0 %v419
        %v442 = vpop.f32.mrf.mxu0
        %v443 = vadd.f32 0.0, %v442
        %444 = vmatmul.f32.gmra.mxu0 %v420
        %v445 = vpop.f32.mrf.mxu0
        %v446 = vadd.f32 0.0, %v445
        %447 = vmatmul.f32.gmra.mxu0 %v421
        %v448 = vpop.f32.mrf.mxu0
        %v449 = vadd.f32 0.0, %v448
        %450 = vdwg.mxu0
        %451 = vst [vmem:[%s238] sm:$0xff] %v440
        %452 = vst [vmem:[%s238 + $0x8] sm:$0xff] %v443
        %453 = vst [vmem:[%s238 + $0x10] sm:$0xff] %v446
        %454 = vst [vmem:[%s238 + $0x18] sm:$0xff] %v449
        %455 = vst [vmem:[%s245] sm:$0xff] %v418
        %456 = vst [vmem:[%s245 + $0x8] sm:$0xff] %v419
        %457 = vst [vmem:[%s245 + $0x10] sm:$0xff] %v420
        %458 = vst [vmem:[%s245 + $0x18] sm:$0xff] %v421
        %s459 = sand.u32 %s102, 1
        %s460 = scalar_lea.sflag [#allocation4], %s459
        %s461 = sand.u32 %s102, 1
        %s462 = smul.addr %s461, 32
        %s463 = scalar_lea.vmem [#allocation7], %s462
        %s464 = sand.u32 %s128, 1
        %s465 = scalar_lea.sflag [#allocation9], %s464
        %s466 = sand.u32 %s128, 1
        %s467 = smul.addr %s466, 32
        %s468 = scalar_lea.vmem [#allocation8], %s467
        // Predicated region
        $region41: #{tpu_custom_call.1} parent=31 // pred_check
          %p469 = pneg %p112
        $region42: #{tpu_custom_call.1} parent=31 // pred_check_branch
          %471 = sbr.rel (%p469) target = $region44
        $region43: #{tpu_custom_call.1} parent=31 // pred_region
          %s472 = smul.u32 4, %s26
          %474 = vsyncadd %s460, 0
          %s475 = smul.addr %s472, 8
          %s476 = scalar_lea.hbm %s3, %s475
          %s477 = sshll.u32 %s463, 4
          %s478 = int_to_ptr.vmem [resolvable:$true] %s477
          %s479 = sshll.u32 %s476, 4
          %s480 = int_to_ptr.hbm [resolvable:$true] %s479
          %485 = dma.vmem_to_hbm [thread:$0]  %s478, 512, %s480, %s460, 128, 128, 8
        $region44: #{tpu_custom_call.1} parent=31 // pred_fallthru
          _
        // Predicated region
        $region45: #{tpu_custom_call.1} parent=31 // pred_check
          %p486 = pneg %p138
        $region46: #{tpu_custom_call.1} parent=31 // pred_check_branch
          %488 = sbr.rel (%p486) target = $region48
        $region47: #{tpu_custom_call.1} parent=31 // pred_region
          %s489 = smul.u32 4, %s26
          %491 = vsyncadd %s465, 0
          %s492 = smul.addr %s489, 8
          %s493 = scalar_lea.hbm %s4, %s492
          %s494 = sshll.u32 %s468, 4
          %s495 = int_to_ptr.vmem [resolvable:$true] %s494
          %s496 = sshll.u32 %s493, 4
          %s497 = int_to_ptr.hbm [resolvable:$true] %s496
          %502 = dma.vmem_to_hbm [thread:$0]  %s495, 512, %s497, %s465, 128, 128, 8
        $region48: #{tpu_custom_call.1} parent=31 // pred_fallthru
          _
      $region32: #{tpu_custom_call.1} parent=5 // pred_fallthru
        _
      %p503 = scmp.le.s32.totalorder 2, %s21
      // Predicated region
      $region49: #{tpu_custom_call.1} parent=5 // pred_check
        %p504 = pneg %p503
      $region50: #{tpu_custom_call.1} parent=5 // pred_check_branch
        %506 = sbr.rel (%p504) target = $region52
      $region51: #{tpu_custom_call.1} parent=5 // pred_region
        %s507 = ssub.s32 %s21, 2
        // Predicated region
        $region53: #{tpu_custom_call.1} parent=51 // pred_check
          %p508 = pneg %p118
        $region54: #{tpu_custom_call.1} parent=51 // pred_check_branch
          %510 = sbr.rel (%p508) target = $region56
        $region55: #{tpu_custom_call.1} parent=51 // pred_region
          %s511 = sand.u32 %s103, 1
          %s512 = scalar_lea.sflag [#allocation4], %s511
          %s513 = sand.u32 %s103, 1
          %s514 = smul.addr %s513, 32
          %s515 = scalar_lea.vmem [#allocation7], %s514
          %517 = dma.done %s512, 512
        $region56: #{tpu_custom_call.1} parent=51 // pred_fallthru
          _
        // Predicated region
        $region57: #{tpu_custom_call.1} parent=51 // pred_check
          %p518 = pneg %p144
        $region58: #{tpu_custom_call.1} parent=51 // pred_check_branch
          %520 = sbr.rel (%p518) target = $region60
        $region59: #{tpu_custom_call.1} parent=51 // pred_region
          %s521 = sand.u32 %s129, 1
          %s522 = scalar_lea.sflag [#allocation9], %s521
          %s523 = sand.u32 %s129, 1
          %s524 = smul.addr %s523, 32
          %s525 = scalar_lea.vmem [#allocation8], %s524
          %527 = dma.done %s522, 512
        $region60: #{tpu_custom_call.1} parent=51 // pred_fallthru
          _
      $region52: #{tpu_custom_call.1} parent=5 // pred_fallthru
        _
    $region6: #{tpu_custom_call.1} parent=1 // loop_footer
      %s25 = sadd.s32 1, %s21
    $region7: #{tpu_custom_call.1} parent=1 // loop_footer_branch
      %20 = sbr.rel target = $region3
    $region8: #{tpu_custom_call.1} parent=1 // loop_exit
      _
    %528 = vsyncpa [#allocation3], 1
    %s529 = scalar_lea.sflag [#allocation3], 1
    %530 = vsyncpa %s529, 1
    %531 = vsyncpa [#allocation6], 1
    %532 = vsyncpa [#allocation4], 1
    %s533 = scalar_lea.sflag [#allocation4], 1
    %534 = vsyncpa %s533, 1
    %535 = vsyncpa [#allocation9], 1
    %s536 = scalar_lea.sflag [#allocation9], 1
    %537 = vsyncpa %s536, 1

// kernel: tpu_custom_call.1
$region0: #{tpu_custom_call.1}
  #allocation0 [shape = 'u32[]', space=smem, size = 0x4, offset = 0x4, fixed_abs, tag = 'smem constant byte address 0x4 - core index']
  #allocation1 [shape = 'u32[72,128]{1,0:T(1,128)}', space=vmem, size = 0x9000, scoped, tag = 'internal scratch']
  %s0 = inlined_call_operand.hbm [shape: f32[128,128], index: 0, kind: input, shape index: {}]
  %s1 = inlined_call_operand.hbm [shape: f32[128,128], index: 1, kind: input, shape index: {}]
  %s2 = inlined_call_operand.vmem [shape: f32[1,128], index: 2, kind: input, shape index: {}]
  %s3 = inlined_call_operand.hbm [shape: f32[128,128], index: 3, kind: output, shape index: {0}]
  %s4 = inlined_call_operand.hbm [shape: f32[128,128], index: 4, kind: output, shape index: {1}]
  %5 = xla_tuple %s3, %s4
  %s6 = sld [smem:[#allocation0]]
  $region61: #{tpu_custom_call.1} parent=0
    _
  %s8 = ssub.s32 1, %s6
  %s9 = scalar_select 0, %s8, %s6
  $region1: #{tpu_custom_call.1} parent=0
    #allocation2 [shape = 'u8[32768]{0}', space=vmem, size = 0x8000, scoped, tag = 'input window, operand 0']
    #allocation3 [shape = 's32[2]{0}', space=sflag, size = 0x8, scoped, tag = 'scoped memory for tpu_custom_call.1']
    #allocation4 [shape = 's32[2]{0}', space=sflag, size = 0x8, scoped, tag = 'scoped memory for tpu_custom_call.1']
    #allocation5 [shape = 'u8[65536]{0}', space=vmem, size = 0x10000, scoped, tag = 'input window, operand 1, single buffered']
    #allocation6 [shape = 's32[1]{0}', space=sflag, size = 0x4, scoped, tag = 'scoped memory for tpu_custom_call.1']
    #allocation7 [shape = 'u8[32768]{0}', space=vmem, size = 0x8000, scoped, tag = 'output window, operand 0']
    #allocation8 [shape = 'u8[32768]{0}', space=vmem, size = 0x8000, scoped, tag = 'output window, operand 1']
    #allocation9 [shape = 's32[2]{0}', space=sflag, size = 0x8, scoped, tag = 'scoped memory for tpu_custom_call.1']
    %10 = vsyncpa [#allocation3], 0
    %s11 = scalar_lea.sflag [#allocation3], 1
    %12 = vsyncpa %s11, 0
    %13 = vsyncpa [#allocation6], 0
    %14 = vsyncpa [#allocation4], 0
    %s15 = scalar_lea.sflag [#allocation4], 1
    %16 = vsyncpa %s15, 0
    %17 = vsyncpa [#allocation9], 0
    %s18 = scalar_lea.sflag [#allocation9], 1
    %19 = vsyncpa %s18, 0
    loop: start=0, step=1, limit=6
    $region2: #{tpu_custom_call.1} parent=1 // loop_pre_header
      _
    $region3: #{tpu_custom_call.1} parent=1 // loop_header
      %s21 = sphi 0, %s25
      %p22 = scmp.ge.s32.totalorder %s21, 6
      %s31 = sphi 0, %s33
      %s34 = sphi 0, %s31
      %s35 = sphi 0, %s34
      %s51 = sphi 0, %s35
      %s55 = sphi 0, %s55
      %s57 = sphi 0, %s55
      %s58 = sphi 0, %s57
      %s72 = sphi 0, %s58
      %s76 = sphi 0, %s76
      %s78 = sphi 0, %s76
      %s79 = sphi 0, %s78
      %s93 = sphi 0, %s79
      %s99 = sphi 0, %s101
      %s102 = sphi 0, %s99
      %s103 = sphi 0, %s102
      %s119 = sphi 0, %s103
      %s125 = sphi 0, %s127
      %s128 = sphi 0, %s125
      %s129 = sphi 0, %s128
      %s145 = sphi 0, %s129
    $region4: #{tpu_custom_call.1} parent=1 // loop_header_branch
      %24 = sbr.rel (%p22) target = $region8
    $region5: #{tpu_custom_call.1} parent=1 // loop_body
      %s26 = ssub.s32 %s21, 1
      %s27 = ssub.s32 %s21, 2
      %s28 = sadd.s32 %s21, 1
      %s29 = ssub.s32 %s21, %s28
      %p30 = scmp.eq.s32.totalorder %s29, 0
      %s32 = sadd.s32 %s31, 1
      %s33 = scalar_select %p30, %s31, %s32
      %p36 = pneg %p30
      %p37 = scmp.eq.s32.totalorder %s21, 3
      %p38 = por %p36, %p37
      %p39 = scmp.ne.s32.totalorder %s31, %s34
      %p40 = scmp.eq.s32.totalorder %s21, 0
      %p41 = por %p39, %p40
      %p42 = scmp.ne.s32.totalorder %s31, %s34
      %p43 = scmp.eq.s32.totalorder %s26, 3
      %p44 = por %p42, %p43
      %p45 = scmp.ne.s32.totalorder %s34, %s35
      %p46 = scmp.eq.s32.totalorder %s26, 0
      %p47 = por %p45, %p46
      %p48 = scmp.ne.s32.totalorder %s34, %s35
      %p49 = scmp.eq.s32.totalorder %s27, 3
      %p50 = por %p48, %p49
      %p52 = scmp.ne.s32.totalorder %s35, %s51
      %p53 = scmp.eq.s32.totalorder %s27, 0
      %p54 = por %p52, %p53
      %s56 = sadd.s32 %s55, 1
      %p59 = scmp.eq.s32.totalorder %s21, 3
      %p60 = scmp.ne.s32.totalorder %s55, %s57
      %p61 = scmp.eq.s32.totalorder %s21, 0
      %p62 = por %p60, %p61
      %p63 = scmp.ne.s32.totalorder %s55, %s57
      %p64 = scmp.eq.s32.totalorder %s26, 3
      %p65 = por %p63, %p64
      %p66 = scmp.ne.s32.totalorder %s57, %s58
      %p67 = scmp.eq.s32.totalorder %s26, 0
      %p68 = por %p66, %p67
      %p69 = scmp.ne.s32.totalorder %s57, %s58
      %p70 = scmp.eq.s32.totalorder %s27, 3
      %p71 = por %p69, %p70
      %p73 = scmp.ne.s32.totalorder %s58, %s72
      %p74 = scmp.eq.s32.totalorder %s27, 0
      %p75 = por %p73, %p74
      %s77 = sadd.s32 %s76, 1
      %p80 = scmp.eq.s32.totalorder %s21, 3
      %p81 = scmp.ne.s32.totalorder %s76, %s78
      %p82 = scmp.eq.s32.totalorder %s21, 0
      %p83 = por %p81, %p82
      %p84 = scmp.ne.s32.totalorder %s76, %s78
      %p85 = scmp.eq.s32.totalorder %s26, 3
      %p86 = por %p84, %p85
      %p87 = scmp.ne.s32.totalorder %s78, %s79
      %p88 = scmp.eq.s32.totalorder %s26, 0
      %p89 = por %p87, %p88
      %p90 = scmp.ne.s32.totalorder %s78, %s79
      %p91 = scmp.eq.s32.totalorder %s27, 3
      %p92 = por %p90, %p91
      %p94 = scmp.ne.s32.totalorder %s79, %s93
      %p95 = scmp.eq.s32.totalorder %s27, 0
      %p96 = por %p94, %p95
      %s97 = ssub.s32 %s21, %s28
      %p98 = scmp.eq.s32.totalorder %s97, 0
      %s100 = sadd.s32 %s99, 1
      %s101 = scalar_select %p98, %s99, %s100
      %p104 = pneg %p98
      %p105 = scmp.eq.s32.totalorder %s21, 3
      %p106 = por %p104, %p105
      %p107 = scmp.ne.s32.totalorder %s99, %s102
      %p108 = scmp.eq.s32.totalorder %s21, 0
      %p109 = por %p107, %p108
      %p110 = scmp.ne.s32.totalorder %s99, %s102
      %p111 = scmp.eq.s32.totalorder %s26, 3
      %p112 = por %p110, %p111
      %p113 = scmp.ne.s32.totalorder %s102, %s103
      %p114 = scmp.eq.s32.totalorder %s26, 0
      %p115 = por %p113, %p114
      %p116 = scmp.ne.s32.totalorder %s102, %s103
      %p117 = scmp.eq.s32.totalorder %s27, 3
      %p118 = por %p116, %p117
      %p120 = scmp.ne.s32.totalorder %s103, %s119
      %p121 = scmp.eq.s32.totalorder %s27, 0
      %p122 = por %p120, %p121
      %s123 = ssub.s32 %s21, %s28
      %p124 = scmp.eq.s32.totalorder %s123, 0
      %s126 = sadd.s32 %s125, 1
      %s127 = scalar_select %p124, %s125, %s126
      %p130 = pneg %p124
      %p131 = scmp.eq.s32.totalorder %s21, 3
      %p132 = por %p130, %p131
      %p133 = scmp.ne.s32.totalorder %s125, %s128
      %p134 = scmp.eq.s32.totalorder %s21, 0
      %p135 = por %p133, %p134
      %p136 = scmp.ne.s32.totalorder %s125, %s128
      %p137 = scmp.eq.s32.totalorder %s26, 3
      %p138 = por %p136, %p137
      %p139 = scmp.ne.s32.totalorder %s128, %s129
      %p140 = scmp.eq.s32.totalorder %s26, 0
      %p141 = por %p139, %p140
      %p142 = scmp.ne.s32.totalorder %s128, %s129
      %p143 = scmp.eq.s32.totalorder %s27, 3
      %p144 = por %p142, %p143
      %p146 = scmp.ne.s32.totalorder %s129, %s145
      %p147 = scmp.eq.s32.totalorder %s27, 0
      %p148 = por %p146, %p147
      %p149 = scmp.le.s32.totalorder 1, %s21
      %p150 = scmp.lt.s32.totalorder %s21, 5
      %p151 = pnand %p149, %p150
      %p152 = pneg %p151
      // Predicated region
      $region9: #{tpu_custom_call.1} parent=5 // pred_check
        _
      $region10: #{tpu_custom_call.1} parent=5 // pred_check_branch
        %154 = sbr.rel (%p151) target = $region12
      $region11: #{tpu_custom_call.1} parent=5 // pred_region
        %s155 = ssub.s32 %s21, 1
        // Predicated region
        $region13: #{tpu_custom_call.1} parent=11 // pred_check
          %p156 = pneg %p68
        $region14: #{tpu_custom_call.1} parent=11 // pred_check_branch
          %158 = sbr.rel (%p156) target = $region16
        $region15: #{tpu_custom_call.1} parent=11 // pred_region
          %160 = vsyncadd [#allocation6], 0
          %s161 = sshll.u32 %s1, 4
          %s162 = int_to_ptr.hbm [resolvable:$true] %s161
          %s163 = sshll.u32 [#allocation5], 4
          %s164 = int_to_ptr.vmem [resolvable:$true] %s163
          %169 = dma.hbm_to_vmem [thread:$0]  %s162, 2048, %s164, [#allocation6], 128, 128, 8
        $region16: #{tpu_custom_call.1} parent=11 // pred_fallthru
          _
        // Predicated region
        $region17: #{tpu_custom_call.1} parent=11 // pred_check
          %p170 = pneg %p89
        $region18: #{tpu_custom_call.1} parent=11 // pred_check_branch
          %172 = sbr.rel (%p170) target = $region20
        $region19: #{tpu_custom_call.1} parent=11 // pred_region
          _
        $region20: #{tpu_custom_call.1} parent=11 // pred_fallthru
          _
      $region12: #{tpu_custom_call.1} parent=5 // pred_fallthru
        _
      %p173 = scmp.lt.s32.totalorder %s21, 4
      // Predicated region
      $region21: #{tpu_custom_call.1} parent=5 // pred_check
        %p174 = pneg %p173
      $region22: #{tpu_custom_call.1} parent=5 // pred_check_branch
        %176 = sbr.rel (%p174) target = $region24
      $region23: #{tpu_custom_call.1} parent=5 // pred_region
        // Predicated region
        $region25: #{tpu_custom_call.1} parent=23 // pred_check
          %p177 = pneg %p41
        $region26: #{tpu_custom_call.1} parent=23 // pred_check_branch
          %179 = sbr.rel (%p177) target = $region28
        $region27: #{tpu_custom_call.1} parent=23 // pred_region
          %s180 = sand.u32 %s31, 1
          %s181 = scalar_lea.sflag [#allocation3], %s180
          %s182 = sand.u32 %s31, 1
          %s183 = smul.addr %s182, 32
          %s184 = scalar_lea.vmem [#allocation2], %s183
          %s185 = smul.u32 4, %s21
          %187 = vsyncadd %s181, 0
          %s188 = smul.addr %s185, 8
          %s189 = scalar_lea.hbm %s0, %s188
          %s190 = sshll.u32 %s189, 4
          %s191 = int_to_ptr.hbm [resolvable:$true] %s190
          %s192 = sshll.u32 %s184, 4
          %s193 = int_to_ptr.vmem [resolvable:$true] %s192
          %198 = dma.hbm_to_vmem [thread:$0]  %s191, 512, %s193, %s181, 128, 128, 8
        $region28: #{tpu_custom_call.1} parent=23 // pred_fallthru
          _
      $region24: #{tpu_custom_call.1} parent=5 // pred_fallthru
        _
      %p199 = scmp.le.s32.totalorder 1, %s21
      %p200 = scmp.lt.s32.totalorder %s21, 5
      %p201 = pnand %p199, %p200
      %p202 = pneg %p201
      // Predicated region
      $region29: #{tpu_custom_call.1} parent=5 // pred_check
        _
      $region30: #{tpu_custom_call.1} parent=5 // pred_check_branch
        %204 = sbr.rel (%p201) target = $region32
      $region31: #{tpu_custom_call.1} parent=5 // pred_region
        %s205 = ssub.s32 %s21, 1
        %s206 = sand.u32 %s34, 1
        %s207 = scalar_lea.sflag [#allocation3], %s206
        %s208 = sand.u32 %s34, 1
        %s209 = smul.addr %s208, 32
        %s210 = scalar_lea.vmem [#allocation2], %s209
        // Predicated region
        $region33: #{tpu_custom_call.1} parent=31 // pred_check
          %p211 = pneg %p47
        $region34: #{tpu_custom_call.1} parent=31 // pred_check_branch
          %213 = sbr.rel (%p211) target = $region36
        $region35: #{tpu_custom_call.1} parent=31 // pred_region
          %215 = dma.done %s207, 512
        $region36: #{tpu_custom_call.1} parent=31 // pred_fallthru
          _
        // Predicated region
        $region37: #{tpu_custom_call.1} parent=31 // pred_check
          %p216 = pneg %p68
        $region38: #{tpu_custom_call.1} parent=31 // pred_check_branch
          %218 = sbr.rel (%p216) target = $region40
        $region39: #{tpu_custom_call.1} parent=31 // pred_region
          %220 = dma.done [#allocation6], 2048
        $region40: #{tpu_custom_call.1} parent=31 // pred_fallthru
          _
        %s221 = sand.u32 %s34, 1
        %s222 = scalar_lea.sflag [#allocation3], %s221
        %s223 = sand.u32 %s34, 1
        %s224 = smul.addr %s223, 32
        %s225 = scalar_lea.vmem [#allocation2], %s224
        %p226 = pneg %p47
        %p227 = pneg %p44
        %p228 = pneg %p68
        %p229 = pneg %p65
        %p230 = pneg %p89
        %p231 = pneg %p86
        %p232 = pneg %p115
        %p233 = pneg %p112
        %s234 = sand.u32 %s102, 1
        %s235 = scalar_lea.sflag [#allocation4], %s234
        %s236 = sand.u32 %s102, 1
        %s237 = smul.addr %s236, 32
        %s238 = scalar_lea.vmem [#allocation7], %s237
        %p239 = pneg %p141
        %p240 = pneg %p138
        %s241 = sand.u32 %s128, 1
        %s242 = scalar_lea.sflag [#allocation9], %s241
        %s243 = sand.u32 %s128, 1
        %s244 = smul.addr %s243, 32
        %s245 = scalar_lea.vmem [#allocation8], %s244
        %s246 = smul.u32 4, %s26
        %s247 = smul.u32 4, %s26
        %s248 = smul.u32 4, %s26
        %v249 = vld [vmem:[%s210] sm:$0xff]
        %v250 = vld [vmem:[%s210 + $0x8] sm:$0xff]
        %v251 = vld [vmem:[%s210 + $0x10] sm:$0xff]
        %v252 = vld [vmem:[%s210 + $0x18] sm:$0xff]
        %v253 = vld [vmem:[#allocation5] sm:$0xff]
        %v254 = vld [vmem:[#allocation5 + $0x8] sm:$0xff]
        %v255 = vld [vmem:[#allocation5 + $0x10] sm:$0xff]
        %v256 = vld [vmem:[#allocation5 + $0x18] sm:$0xff]
        %v257 = vld [vmem:[#allocation5 + $0x20] sm:$0xff]
        %v258 = vld [vmem:[#allocation5 + $0x28] sm:$0xff]
        %v259 = vld [vmem:[#allocation5 + $0x30] sm:$0xff]
        %v260 = vld [vmem:[#allocation5 + $0x38] sm:$0xff]
        %v261 = vld [vmem:[#allocation5 + $0x40] sm:$0xff]
        %v262 = vld [vmem:[#allocation5 + $0x48] sm:$0xff]
        %v263 = vld [vmem:[#allocation5 + $0x50] sm:$0xff]
        %v264 = vld [vmem:[#allocation5 + $0x58] sm:$0xff]
        %v265 = vld [vmem:[#allocation5 + $0x60] sm:$0xff]
        %v266 = vld [vmem:[#allocation5 + $0x68] sm:$0xff]
        %v267 = vld [vmem:[#allocation5 + $0x70] sm:$0xff]
        %v268 = vld [vmem:[#allocation5 + $0x78] sm:$0xff]
        %v269 = vld [vmem:[%s2] sm:$0x1]
        %v271 = vperm.slane %v269, 0
        %273 = vmatpush.xpose.msra.mxu0 %v268
        %274 = vmatpush.xpose.msra.mxu0 %v267
        %275 = vmatpush.xpose.msra.mxu0 %v266
        %276 = vmatpush.xpose.msra.mxu0 %v265
        %277 = vmatpush.xpose.msra.mxu0 %v264
        %278 = vmatpush.xpose.msra.mxu0 %v263
        %279 = vmatpush.xpose.msra.mxu0 %v262
        %280 = vmatpush.xpose.msra.mxu0 %v261
        %281 = vmatpush.xpose.msra.mxu0 %v260
        %282 = vmatpush.xpose.msra.mxu0 %v259
        %283 = vmatpush.xpose.msra.mxu0 %v258
        %284 = vmatpush.xpose.msra.mxu0 %v257
        %285 = vmatpush.xpose.msra.mxu0 %v256
        %286 = vmatpush.xpose.msra.mxu0 %v255
        %287 = vmatpush.xpose.msra.mxu0 %v254
        %288 = vmatpush.xpose.msra.mxu0 %v253
        %289 = vmatmul.f32.gmra.mxu0 %v249
        %v290 = vpop.f32.mrf.mxu0
        %v291 = vadd.f32 %v271, %v290
        %292 = vmatmul.f32.gmra.mxu0 %v250
        %v293 = vpop.f32.mrf.mxu0
        %v294 = vadd.f32 %v271, %v293
        %295 = vmatmul.f32.gmra.mxu0 %v251
        %v296 = vpop.f32.mrf.mxu0
        %v297 = vadd.f32 %v271, %v296
        %298 = vmatmul.f32.gmra.mxu0 %v252
        %v299 = vpop.f32.mrf.mxu0
        %v300 = vadd.f32 %v271, %v299
        %301 = vdwg.mxu0
        %302 = vmax.xlane.f32.xlu0 %v291
        %v303 = vpop.xlane.xlu0 %302
        %304 = vmax.xlane.f32.xlu0 %v294
        %v305 = vpop.xlane.xlu0 %304
        %306 = vmax.xlane.f32.xlu0 %v297
        %v307 = vpop.xlane.xlu0 %306
        %308 = vmax.xlane.f32.xlu0 %v300
        %v309 = vpop.xlane.xlu0 %308
        %v310 = vsub.f32 %v291, %v303
        %v311 = vsub.f32 %v294, %v305
        %v312 = vsub.f32 %v297, %v307
        %v313 = vsub.f32 %v300, %v309
        %v314 = vmul.f32 %v310, 1.442695
        %v315 = vpow.pop %v314
        %v316 = vmul.f32 %v311, 1.442695
        %v317 = vpow.pop %v316
        %v318 = vmul.f32 %v312, 1.442695
        %v319 = vpow.pop %v318
        %v320 = vmul.f32 %v313, 1.442695
        %v321 = vpow.pop %v320
        %322 = vadd.xlane.f32.xlu0 %v315
        %v323 = vpop.xlane.xlu0 %322
        %324 = vadd.xlane.f32.xlu0 %v317
        %v325 = vpop.xlane.xlu0 %324
        %326 = vadd.xlane.f32.xlu0 %v319
        %v327 = vpop.xlane.xlu0 %326
        %328 = vadd.xlane.f32.xlu0 %v321
        %v329 = vpop.xlane.xlu0 %328
        %v330 = vrcp.pop %v323
        %v331 = vrcp.pop %v325
        %v332 = vrcp.pop %v327
        %v333 = vrcp.pop %v329
        %v334 = vmul.f32 %v323, %v330
        %v335 = vmul.f32 %v325, %v331
        %v336 = vmul.f32 %v327, %v332
        %v337 = vmul.f32 %v329, %v333
        %v338 = vsub.f32 2.0, %v334
        %v339 = vsub.f32 2.0, %v335
        %v340 = vsub.f32 2.0, %v336
        %v341 = vsub.f32 2.0, %v337
        %v342 = vmul.f32 %v330, %v338
        %v343 = vmul.f32 %v331, %v339
        %v344 = vmul.f32 %v332, %v340
        %v345 = vmul.f32 %v333, %v341
        %v346 = vmul.f32 %v315, %v342
        %v347 = vmul.f32 %v317, %v343
        %v348 = vmul.f32 %v319, %v344
        %v349 = vmul.f32 %v321, %v345
        %v350 = vsub.f32 %v346, 0.0025
        %v351 = vsub.f32 %v347, 0.0025
        %v352 = vsub.f32 %v348, 0.0025
        %v353 = vsub.f32 %v349, 0.0025
        %v354 = vmax.f32 %v350, 0.0
        %v355 = vmax.f32 %v351, 0.0
        %v356 = vmax.f32 %v352, 0.0
        %v357 = vmax.f32 %v353, 0.0
        %v358 = vmul.f32 %v354, %v346
        %v359 = vmul.f32 %v355, %v347
        %v360 = vmul.f32 %v356, %v348
        %v361 = vmul.f32 %v357, %v349
        %v362 = vand.u32 2147483647, %v350
        %v363 = vand.u32 2147483647, %v351
        %v364 = vand.u32 2147483647, %v352
        %v365 = vand.u32 2147483647, %v353
        %v366 = vadd.f32 %v362, 1e-12
        %v367 = vadd.f32 %v363, 1e-12
        %v368 = vadd.f32 %v364, 1e-12
        %v369 = vadd.f32 %v365, 1e-12
        %v370 = vrcp.pop %v366
        %v371 = vrcp.pop %v367
        %v372 = vrcp.pop %v368
        %v373 = vrcp.pop %v369
        %v374 = vmul.f32 %v366, %v370
        %v375 = vmul.f32 %v367, %v371
        %v376 = vmul.f32 %v368, %v372
        %v377 = vmul.f32 %v369, %v373
        %v378 = vsub.f32 2.0, %v374
        %v379 = vsub.f32 2.0, %v375
        %v380 = vsub.f32 2.0, %v376
        %v381 = vsub.f32 2.0, %v377
        %v382 = vmul.f32 %v370, %v378
        %v383 = vmul.f32 %v371, %v379
        %v384 = vmul.f32 %v372, %v380
        %v385 = vmul.f32 %v373, %v381
        %v386 = vmul.f32 %v358, %v382
        %v387 = vmul.f32 %v359, %v383
        %v388 = vmul.f32 %v360, %v384
        %v389 = vmul.f32 %v361, %v385
        %390 = vadd.xlane.f32.xlu0 %v386
        %v391 = vpop.xlane.xlu0 %390
        %392 = vadd.xlane.f32.xlu0 %v387
        %v393 = vpop.xlane.xlu0 %392
        %394 = vadd.xlane.f32.xlu0 %v388
        %v395 = vpop.xlane.xlu0 %394
        %396 = vadd.xlane.f32.xlu0 %v389
        %v397 = vpop.xlane.xlu0 %396
        %v398 = vmax.f32 %v391, 1e-12
        %v399 = vmax.f32 %v393, 1e-12
        %v400 = vmax.f32 %v395, 1e-12
        %v401 = vmax.f32 %v397, 1e-12
        %v402 = vrcp.pop %v398
        %v403 = vrcp.pop %v399
        %v404 = vrcp.pop %v400
        %v405 = vrcp.pop %v401
        %v406 = vmul.f32 %v398, %v402
        %v407 = vmul.f32 %v399, %v403
        %v408 = vmul.f32 %v400, %v404
        %v409 = vmul.f32 %v401, %v405
        %v410 = vsub.f32 2.0, %v406
        %v411 = vsub.f32 2.0, %v407
        %v412 = vsub.f32 2.0, %v408
        %v413 = vsub.f32 2.0, %v409
        %v414 = vmul.f32 %v402, %v410
        %v415 = vmul.f32 %v403, %v411
        %v416 = vmul.f32 %v404, %v412
        %v417 = vmul.f32 %v405, %v413
        %v418 = vmul.f32 %v386, %v414
        %v419 = vmul.f32 %v387, %v415
        %v420 = vmul.f32 %v388, %v416
        %v421 = vmul.f32 %v389, %v417
        %422 = vmatpush.msra.mxu0 %v268
        %423 = vmatpush.msra.mxu0 %v267
        %424 = vmatpush.msra.mxu0 %v266
        %425 = vmatpush.msra.mxu0 %v265
        %426 = vmatpush.msra.mxu0 %v264
        %427 = vmatpush.msra.mxu0 %v263
        %428 = vmatpush.msra.mxu0 %v262
        %429 = vmatpush.msra.mxu0 %v261
        %430 = vmatpush.msra.mxu0 %v260
        %431 = vmatpush.msra.mxu0 %v259
        %432 = vmatpush.msra.mxu0 %v258
        %433 = vmatpush.msra.mxu0 %v257
        %434 = vmatpush.msra.mxu0 %v256
        %435 = vmatpush.msra.mxu0 %v255
        %436 = vmatpush.msra.mxu0 %v254
        %437 = vmatpush.msra.mxu0 %v253
        %438 = vmatmul.f32.gmra.mxu0 %v418
        %v439 = vpop.f32.mrf.mxu0
        %v440 = vadd.f32 0.0, %v439
        %441 = vmatmul.f32.gmra.mxu0 %v419
        %v442 = vpop.f32.mrf.mxu0
        %v443 = vadd.f32 0.0, %v442
        %444 = vmatmul.f32.gmra.mxu0 %v420
        %v445 = vpop.f32.mrf.mxu0
        %v446 = vadd.f32 0.0, %v445
        %447 = vmatmul.f32.gmra.mxu0 %v421
        %v448 = vpop.f32.mrf.mxu0
        %v449 = vadd.f32 0.0, %v448
        %450 = vdwg.mxu0
        %451 = vst [vmem:[%s238] sm:$0xff] %v440
        %452 = vst [vmem:[%s238 + $0x8] sm:$0xff] %v443
        %453 = vst [vmem:[%s238 + $0x10] sm:$0xff] %v446
        %454 = vst [vmem:[%s238 + $0x18] sm:$0xff] %v449
        %455 = vst [vmem:[%s245] sm:$0xff] %v418
        %456 = vst [vmem:[%s245 + $0x8] sm:$0xff] %v419
        %457 = vst [vmem:[%s245 + $0x10] sm:$0xff] %v420
        %458 = vst [vmem:[%s245 + $0x18] sm:$0xff] %v421
        %s459 = sand.u32 %s102, 1
        %s460 = scalar_lea.sflag [#allocation4], %s459
        %s461 = sand.u32 %s102, 1
        %s462 = smul.addr %s461, 32
        %s463 = scalar_lea.vmem [#allocation7], %s462
        %s464 = sand.u32 %s128, 1
        %s465 = scalar_lea.sflag [#allocation9], %s464
        %s466 = sand.u32 %s128, 1
        %s467 = smul.addr %s466, 32
        %s468 = scalar_lea.vmem [#allocation8], %s467
        // Predicated region
        $region41: #{tpu_custom_call.1} parent=31 // pred_check
          %p469 = pneg %p112
        $region42: #{tpu_custom_call.1} parent=31 // pred_check_branch
          %471 = sbr.rel (%p469) target = $region44
        $region43: #{tpu_custom_call.1} parent=31 // pred_region
          %s472 = smul.u32 4, %s26
          %474 = vsyncadd %s460, 0
          %s475 = smul.addr %s472, 8
          %s476 = scalar_lea.hbm %s3, %s475
          %s477 = sshll.u32 %s463, 4
          %s478 = int_to_ptr.vmem [resolvable:$true] %s477
          %s479 = sshll.u32 %s476, 4
          %s480 = int_to_ptr.hbm [resolvable:$true] %s479
          %485 = dma.vmem_to_hbm [thread:$0]  %s478, 512, %s480, %s460, 128, 128, 8
        $region44: #{tpu_custom_call.1} parent=31 // pred_fallthru
          _
        // Predicated region
        $region45: #{tpu_custom_call.1} parent=31 // pred_check
          %p486 = pneg %p138
        $region46: #{tpu_custom_call.1} parent=31 // pred_check_branch
          %488 = sbr.rel (%p486) target = $region48
        $region47: #{tpu_custom_call.1} parent=31 // pred_region
          %s489 = smul.u32 4, %s26
          %491 = vsyncadd %s465, 0
          %s492 = smul.addr %s489, 8
          %s493 = scalar_lea.hbm %s4, %s492
          %s494 = sshll.u32 %s468, 4
          %s495 = int_to_ptr.vmem [resolvable:$true] %s494
          %s496 = sshll.u32 %s493, 4
          %s497 = int_to_ptr.hbm [resolvable:$true] %s496
          %502 = dma.vmem_to_hbm [thread:$0]  %s495, 512, %s497, %s465, 128, 128, 8
        $region48: #{tpu_custom_call.1} parent=31 // pred_fallthru
          _
      $region32: #{tpu_custom_call.1} parent=5 // pred_fallthru
        _
      %p503 = scmp.le.s32.totalorder 2, %s21
      // Predicated region
      $region49: #{tpu_custom_call.1} parent=5 // pred_check
        %p504 = pneg %p503
      $region50: #{tpu_custom_call.1} parent=5 // pred_check_branch
        %506 = sbr.rel (%p504) target = $region52
      $region51: #{tpu_custom_call.1} parent=5 // pred_region
        %s507 = ssub.s32 %s21, 2
        // Predicated region
        $region53: #{tpu_custom_call.1} parent=51 // pred_check
          %p508 = pneg %p118
        $region54: #{tpu_custom_call.1} parent=51 // pred_check_branch
          %510 = sbr.rel (%p508) target = $region56
        $region55: #{tpu_custom_call.1} parent=51 // pred_region
          %s511 = sand.u32 %s103, 1
          %s512 = scalar_lea.sflag [#allocation4], %s511
          %s513 = sand.u32 %s103, 1
          %s514 = smul.addr %s513, 32
          %s515 = scalar_lea.vmem [#allocation7], %s514
          %517 = dma.done %s512, 512
        $region56: #{tpu_custom_call.1} parent=51 // pred_fallthru
          _
        // Predicated region
        $region57: #{tpu_custom_call.1} parent=51 // pred_check
          %p518 = pneg %p144
        $region58: #{tpu_custom_call.1} parent=51 // pred_check_branch
          %520 = sbr.rel (%p518) target = $region60
        $region59: #{tpu_custom_call.1} parent=51 // pred_region
          %s521 = sand.u32 %s129, 1
          %s522 = scalar_lea.sflag [#allocation9], %s521
          %s523 = sand.u32 %s129, 1
          %s524 = smul.addr %s523, 32
          %s525 = scalar_lea.vmem [#allocation8], %s524
          %527 = dma.done %s522, 512
        $region60: #{tpu_custom_call.1} parent=51 // pred_fallthru
          _
      $region52: #{tpu_custom_call.1} parent=5 // pred_fallthru
        _
    $region6: #{tpu_custom_call.1} parent=1 // loop_footer
      %s25 = sadd.s32 1, %s21
    $region7: #{tpu_custom_call.1} parent=1 // loop_footer_branch
      %20 = sbr.rel target = $region3
    $region8: #{tpu_custom_call.1} parent=1 // loop_exit
      _
    %528 = vsyncpa [#allocation3], 1
    %s529 = scalar_lea.sflag [#allocation3], 1
    %530 = vsyncpa %s529, 1
    %531 = vsyncpa [#allocation6], 1
    %532 = vsyncpa [#allocation4], 1
    %s533 = scalar_lea.sflag [#allocation4], 1
    %534 = vsyncpa %s533, 1
    %535 = vsyncpa [#allocation9], 1
    %s536 = scalar_lea.sflag [#allocation9], 1
    %537 = vsyncpa %s536, 1

</llo_original>
